<compile_context>
chip_gen: v6e
topology: v6e:2x2x1
jax: 0.10.0
libtpu: 0.0.40
codegen_flags: <defaults>
</compile_context>

<pallas_src>
import jax
import jax.numpy as jnp
from jax.experimental import pallas as pl
from jax.experimental.pallas import tpu as pltpu


# ---------------------------------------------------------------------------
# Hardware-aware tiling helpers
# ---------------------------------------------------------------------------

def _vmem_capacity_bytes():
    """Physical VMEM per TensorCore; conservative fallback if the query fails."""
    try:
        info = pltpu.get_tpu_info()
        cap = getattr(info, "vmem_capacity_bytes", None)
        if cap:
            return int(cap)
    except Exception:
        pass
    return 64 * 1024 * 1024  # v7x per-TC VMEM; safe lower bound for v5e/v6e too


def _pick_tile_rows(H, C, W, x_itemsize, vmem_cap):
    """Rows of H per grid step.

    Targets ~vmem_cap/32 bytes of logits per block (~4 MiB on 128 MiB parts,
    ~2 MiB on 64 MiB v7x) so 2 inputs x 2 pipeline buffers plus the in-kernel
    f32 temporaries stay inside the scoped-VMEM limit while amortizing the
    ~0.35us fixed per-step overhead.
    """
    x_block_target = max(1 << 20, vmem_cap // 32)
    rows = x_block_target // max(1, C * W * x_itemsize)
    rows = max(8, (rows // 8) * 8)
    if H <= rows:
        return H                      # single tile; also covers H % 8 != 0
    # Prefer a multiple-of-8 tile that divides H exactly (no ragged tail).
    t = rows
    while t >= 8:
        if H % t == 0:
            return t
        t -= 8
    return rows                       # ragged last tile, masked in-kernel


# ---------------------------------------------------------------------------
# Kernel
# ---------------------------------------------------------------------------

def _make_kernel(C, tH, H, W, Wc, fuse_w_upsample, ragged):
    """x_ref: (C, tH, W) logits (native dtype); t_ref: (C, tH, Wc) f32 target
    (H already at output resolution, W still coarse); o_ref: (R, W) partials."""

    def kernel(x_ref, t_ref, o_ref):
        x = x_ref[...].astype(jnp.float32)                    # (C, tH, W)

        # Channel log-softmax pieces.  C is the *leading* axis, so max/sum are
        # elementwise VPU reductions over fully packed (8,128) vregs (no XLU).
        m = jnp.max(x, axis=0, keepdims=True)                 # (1, tH, W)
        e = jnp.exp(x - m)                                    # (C, tH, W)  EUP
        s = jnp.sum(e, axis=0, keepdims=True)                 # (1, tH, W)
        log_s = jnp.log(s)                                    # (1, tH, W)  EUP

        # Nearest-neighbor W replication of the coarse target, fused in-kernel
        # on the otherwise idle MXU: Rw[i, j] = 1 iff j*Wc//W == i (the torch
        # nearest column map).  hi/lo bf16 split keeps the selection exact
        # even if the default-precision f32 dot is run as bf16 passes.
        if fuse_w_upsample:
            tc = t_ref[...].reshape(C * tH, Wc)               # f32
            src = jax.lax.broadcasted_iota(jnp.int32, (Wc, W), 0)
            dst = jax.lax.broadcasted_iota(jnp.int32, (Wc, W), 1)
            jw = dst * Wc
            rw = jnp.logical_and(jw >= src * W, jw < (src + 1) * W)
            rw = rw.astype(jnp.float32)                       # (Wc, W) 0/1
            tc_hi = tc.astype(jnp.bfloat16).astype(jnp.float32)
            tc_lo = tc - tc_hi
            t = (jnp.dot(tc_hi, rw, preferred_element_type=jnp.float32)
                 + jnp.dot(tc_lo, rw, preferred_element_type=jnp.float32))
            t = t.reshape(C, tH, W)
        else:                                                 # Wc == W
            t = t_ref[...]

        # BCEWithLogits(z, t) with z = log_softmax(x) <= 0:
        #   max(z,0) - z*t + log1p(exp(-|z|)) = (m + log_s - x)*t
        #                                       + log(s + e) - log_s
        # (log1p(e/s) == log(s+e) - log_s reuses log_s and needs no reciprocal)
        bce = (m + log_s - x) * t + (jnp.log(s + e) - log_s)  # (C, tH, W)

        partial = jnp.sum(bce, axis=0)                        # (tH, W)

        if ragged:
            # Only compiled when H % tH != 0.  Mask the post-C-sum partial
            # (1/C the work) with a select so NaN/Inf from the undefined tail
            # rows of the last block cannot leak into the result.
            h0 = pl.program_id(1) * tH
            row = jax.lax.broadcasted_iota(jnp.int32, (tH, W), 0) + h0
            partial = jnp.where(row < H, partial, 0.0)

        if tH % 8 == 0:
            # Fold rows into 8 sublanes with elementwise vreg adds only.
            o_ref[...] = partial.reshape(tH // 8, 8, W).sum(axis=0)   # (8, W)
        else:
            o_ref[...] = jnp.sum(partial, axis=0, keepdims=True)       # (1, W)

    return kernel


# ---------------------------------------------------------------------------
# Per-item wrapper
# ---------------------------------------------------------------------------

def _bce_logsoftmax_mean(x, target_f32):
    """mean_elems(BCEWithLogits(log_softmax(x, 1), nearest_resize(target)))."""
    N, C, H, W = x.shape
    _, _, Hin, Win = target_f32.shape

    # H-direction nearest resize in the wrapper (exact row gather at the
    # *coarse* W width).  The W replication is fused into the kernel, so the
    # HBM target stream stays W/Win times smaller than full resolution.
    # TODO(synk): also fuse the H replication (coarse-row BlockSpec + in-kernel
    # row repeat) to drop the remaining (N, C, H, Win) materialization.
    if H != Hin:
        hi = (jnp.arange(H) * Hin // H).astype(jnp.int32)
        t_h = target_f32[:, :, hi, :]
    else:
        t_h = target_f32                                       # (N, C, H, Win)

    vmem_cap = _vmem_capacity_bytes()
    tH = _pick_tile_rows(H, C, W, x.dtype.itemsize, vmem_cap)
    n_tiles = pl.cdiv(H, tH)
    ragged = (H % tH) != 0
    R = 8 if tH % 8 == 0 else 1
    fuse_w = (Win != W)

    kernel = _make_kernel(C, tH, H, W, Win, fuse_w, ragged)

    # Per-step VMEM footprint: 2 pipeline buffers per input + f32 temporaries.
    xblk = C * tH * W * x.dtype.itemsize
    tblk = C * tH * Win * 4
    temps = 4 * C * tH * W * 4 + 6 * tH * W * 4
    est = 2 * xblk + 2 * tblk + 2 * R * W * 4 + temps
    vmem_limit = int(min(vmem_cap, max(32 * 1024 * 1024, est * 3 // 2)))

    partials = pl.pallas_call(
        kernel,
        out_shape=jax.ShapeDtypeStruct((N, n_tiles, R, W), jnp.float32),
        grid_spec=pltpu.PrefetchScalarGridSpec(
            num_scalar_prefetch=0,
            grid=(N, n_tiles),
            in_specs=[
                pl.BlockSpec((None, C, tH, W), lambda n, i: (n, 0, i, 0)),
                pl.BlockSpec((None, C, tH, Win), lambda n, i: (n, 0, i, 0)),
            ],
            out_specs=pl.BlockSpec((None, None, R, W),
                                   lambda n, i: (n, i, 0, 0)),
        ),
        compiler_params=pltpu.CompilerParams(
            dimension_semantics=("parallel", "parallel"),  # megacore-shardable
            vmem_limit_bytes=vmem_limit,
        ),
    )(x, t_h)

    # Tiny lane-dense partials -> scalar (plain XLA).
    return jnp.sum(partials) / float(N * C * H * W)


# ---------------------------------------------------------------------------
# Module-level API (matches BCrossEntropyLoss2.forward)
# ---------------------------------------------------------------------------

def nearest_resize_nchw(t, size):
    """Reference glue: F.interpolate(mode='nearest') on NCHW.

    Note: uses i*Hin//Hout, which matches torch for integer scale ratios; for
    non-integer ratios torch's float floor can pick a neighboring source pixel."""
    _, _, Hin, Win = t.shape
    Hout, Wout = size
    hi = (jnp.arange(Hout) * Hin // Hout).astype(jnp.int32)
    wi = (jnp.arange(Wout) * Win // Wout).astype(jnp.int32)
    return t[:, :, hi, :][:, :, :, wi]


def bcross_entropy_loss2(inputs, target, weight=None):
    # TODO(synk): per-element `weight` tensor not plumbed into the kernel
    # (module default is None; a non-None weight is not supported here).
    if not isinstance(inputs, tuple):
        inputs = (inputs,)
    target_f32 = target.astype(jnp.float32)   # module's target.float(), cast once
    loss = jnp.float32(0.0)
    # TODO(synk): one pallas_call per scale; for tiny heads (< a few hundred
    # KiB per item) the fixed dispatch/warmup cost dominates — fusing all
    # scales into one grid would amortize it and give megacore enough steps.
    for item in inputs:
        loss = loss + _bce_logsoftmax_mean(item, target_f32)
    return loss / len(inputs)


def _reference(inputs, target):
    """Pure-JAX reference of the PyTorch forward, for a sanity check."""
    if not isinstance(inputs, tuple):
        inputs = (inputs,)
    loss = jnp.float32(0.0)
    for item in inputs:
        h, w = item.shape[2], item.shape[3]
        t = nearest_resize_nchw(target.astype(jnp.float32), (h, w))
        z = jax.nn.log_softmax(item.astype(jnp.float32), axis=1)
        bce = jnp.maximum(z, 0.0) - z * t + jnp.log1p(jnp.exp(-jnp.abs(z)))
        loss = loss + jnp.mean(bce)
    return loss / len(inputs)


if __name__ == "__main__":
    key = jax.random.PRNGKey(0)
    kx1, kx2, kt = jax.random.split(key, 3)
    # tuple of multi-scale logits (N, C, H, W); target at a coarser spatial
    # size to exercise the nearest-neighbor interpolate (H gather + fused W).
    x1 = jax.random.normal(kx1, (2, 4, 16, 16), dtype=jnp.float32)
    x2 = jax.random.normal(kx2, (2, 4, 8, 8), dtype=jnp.float32)
    target = jax.random.uniform(kt, (2, 4, 8, 8), dtype=jnp.float32)

    inputs = (x1, x2)
    out = jax.block_until_ready(bcross_entropy_loss2(inputs, target))
    ref = jax.block_until_ready(_reference(inputs, target))
    assert jnp.allclose(out, ref, atol=1e-3, rtol=1e-3), (out, ref)

    # also the single-tensor (non-tuple) path
    out1 = jax.block_until_ready(bcross_entropy_loss2(x1, target))
    ref1 = jax.block_until_ready(_reference(x1, target))
    assert jnp.allclose(out1, ref1, atol=1e-3, rtol=1e-3), (out1, ref1)

    print("KERNEL_OK")
</pallas_src>

<mosaic_0001>
module attributes {stable_mosaic.version = 11 : i64} {
  func.func @kernel(%arg0: i32, %arg1: i32, %arg2: memref<1x4x16x16xf32, #tpu.memory_space<vmem>>, %arg3: memref<1x4x16x8xf32, #tpu.memory_space<vmem>>, %arg4: memref<1x1x8x16xf32, #tpu.memory_space<vmem>>) attributes {dimension_semantics = [#tpu.dimension_semantics<parallel>, #tpu.dimension_semantics<parallel>], iteration_bounds = array<i64: 2, 1>, scalar_prefetch = 0 : i64, scratch_operands = 0 : i64, tpu.core_type = #tpu.core_type<tc>, window_params = [{transform_indices = @transform_0, window_bounds = array<i64: 1, 4, 16, 16>}, {transform_indices = @transform_1, window_bounds = array<i64: 1, 4, 16, 8>}, {transform_indices = @transform_2, window_bounds = array<i64: 1, 1, 8, 16>}]} {
    %c0 = arith.constant 0 : index
    %c0_0 = arith.constant 0 : index
    %c0_1 = arith.constant 0 : index
    %c0_2 = arith.constant 0 : index
    %0 = vector.load %arg2[%c0, %c0_0, %c0_1, %c0_2] : memref<1x4x16x16xf32, #tpu.memory_space<vmem>>, vector<1x4x16x16xf32>
    %1 = vector.shape_cast %0 : vector<1x4x16x16xf32> to vector<4x16x16xf32>
    %cst = arith.constant dense<0xFF800000> : vector<16x16xf32>
    %2 = vector.multi_reduction <maximumf>, %1, %cst [0] : vector<4x16x16xf32> to vector<16x16xf32>
    %3 = vector.shape_cast %2 : vector<16x16xf32> to vector<1x16x16xf32>
    %4 = vector.broadcast %3 : vector<1x16x16xf32> to vector<4x16x16xf32>
    %5 = arith.subf %1, %4 : vector<4x16x16xf32>
    %6 = math.exp %5 : vector<4x16x16xf32>
    %cst_3 = arith.constant dense<0.000000e+00> : vector<16x16xf32>
    %7 = vector.multi_reduction <add>, %6, %cst_3 [0] : vector<4x16x16xf32> to vector<16x16xf32>
    %8 = vector.shape_cast %7 : vector<16x16xf32> to vector<1x16x16xf32>
    %9 = math.log %8 : vector<1x16x16xf32>
    %c0_4 = arith.constant 0 : index
    %c0_5 = arith.constant 0 : index
    %c0_6 = arith.constant 0 : index
    %c0_7 = arith.constant 0 : index
    %10 = vector.load %arg3[%c0_4, %c0_5, %c0_6, %c0_7] : memref<1x4x16x8xf32, #tpu.memory_space<vmem>>, vector<1x4x16x8xf32>
    %11 = vector.shape_cast %10 : vector<1x4x16x8xf32> to vector<4x16x8xf32>
    %12 = vector.shape_cast %11 : vector<4x16x8xf32> to vector<64x8xf32>
    %13 = tpu.iota {dimensions = array<i32: 0>} : vector<8x16xi32>
    %14 = tpu.iota {dimensions = array<i32: 1>} : vector<8x16xi32>
    %c8_i32 = arith.constant 8 : i32
    %15 = vector.broadcast %c8_i32 : i32 to vector<8x16xi32>
    %16 = arith.muli %14, %15 : vector<8x16xi32>
    %c16_i32 = arith.constant 16 : i32
    %17 = vector.broadcast %c16_i32 : i32 to vector<8x16xi32>
    %18 = arith.muli %13, %17 : vector<8x16xi32>
    %19 = arith.cmpi sge, %16, %18 : vector<8x16xi32>
    %c1_i32 = arith.constant 1 : i32
    %20 = vector.broadcast %c1_i32 : i32 to vector<8x16xi32>
    %21 = arith.addi %13, %20 : vector<8x16xi32>
    %c16_i32_8 = arith.constant 16 : i32
    %22 = vector.broadcast %c16_i32_8 : i32 to vector<8x16xi32>
    %23 = arith.muli %21, %22 : vector<8x16xi32>
    %24 = arith.cmpi slt, %16, %23 : vector<8x16xi32>
    %25 = arith.andi %19, %24 : vector<8x16xi1>
    %26 = arith.extui %25 : vector<8x16xi1> to vector<8x16xi32>
    %27 = arith.sitofp %26 : vector<8x16xi32> to vector<8x16xf32>
    %28 = arith.truncf %12 : vector<64x8xf32> to vector<64x8xbf16>
    %29 = arith.extf %28 : vector<64x8xbf16> to vector<64x8xf32>
    %30 = arith.subf %12, %29 : vector<64x8xf32>
    %cst_9 = arith.constant dense<0.000000e+00> : vector<64x16xf32>
    %31 = tpu.matmul %29, %27, %cst_9 {dimension_numbers = #tpu.dot_dimension_numbers<[1], [0], [0], [1], [0, 0, 1, 1], [], []>} : vector<64x8xf32>, vector<8x16xf32>, vector<64x16xf32> -> vector<64x16xf32>
    %cst_10 = arith.constant dense<0.000000e+00> : vector<64x16xf32>
    %32 = tpu.matmul %30, %27, %cst_10 {dimension_numbers = #tpu.dot_dimension_numbers<[1], [0], [0], [1], [0, 0, 1, 1], [], []>} : vector<64x8xf32>, vector<8x16xf32>, vector<64x16xf32> -> vector<64x16xf32>
    %33 = arith.addf %31, %32 : vector<64x16xf32>
    %34 = vector.shape_cast %33 : vector<64x16xf32> to vector<4x16x16xf32>
    %35 = arith.addf %3, %9 : vector<1x16x16xf32>
    %36 = vector.broadcast %35 : vector<1x16x16xf32> to vector<4x16x16xf32>
    %37 = arith.subf %36, %1 : vector<4x16x16xf32>
    %38 = arith.mulf %37, %34 : vector<4x16x16xf32>
    %39 = vector.broadcast %8 : vector<1x16x16xf32> to vector<4x16x16xf32>
    %40 = arith.addf %39, %6 : vector<4x16x16xf32>
    %41 = math.log %40 : vector<4x16x16xf32>
    %42 = vector.broadcast %9 : vector<1x16x16xf32> to vector<4x16x16xf32>
    %43 = arith.subf %41, %42 : vector<4x16x16xf32>
    %44 = arith.addf %38, %43 : vector<4x16x16xf32>
    %cst_11 = arith.constant dense<0.000000e+00> : vector<16x16xf32>
    %45 = vector.multi_reduction <add>, %44, %cst_11 [0] : vector<4x16x16xf32> to vector<16x16xf32>
    %46 = vector.shape_cast %45 : vector<16x16xf32> to vector<2x8x16xf32>
    %cst_12 = arith.constant dense<0.000000e+00> : vector<8x16xf32>
    %47 = vector.multi_reduction <add>, %46, %cst_12 [0] : vector<2x8x16xf32> to vector<8x16xf32>
    %c0_13 = arith.constant 0 : index
    %c0_14 = arith.constant 0 : index
    %c0_15 = arith.constant 0 : index
    %c0_16 = arith.constant 0 : index
    %48 = vector.load %arg4[%c0_13, %c0_14, %c0_15, %c0_16] : memref<1x1x8x16xf32, #tpu.memory_space<vmem>>, vector<1x1x8x16xf32>
    %49 = vector.shape_cast %48 : vector<1x1x8x16xf32> to vector<8x16xf32>
    %50 = vector.shape_cast %47 : vector<8x16xf32> to vector<1x1x8x16xf32>
    tpu.vector_store %arg4[%c0_13, %c0_14, %c0_15, %c0_16], %50 {strides = array<i32>} : memref<1x1x8x16xf32, #tpu.memory_space<vmem>>, vector<1x1x8x16xf32>,
    return
  }
  func.func @transform_0(%arg0: i32, %arg1: i32) -> (i32, i32, i32, i32) {
    %c0_i32 = arith.constant 0 : i32
    %c0_i32_0 = arith.constant 0 : i32
    %c0_i32_1 = arith.constant 0 : i32
    return %arg0, %c0_i32, %arg1, %c0_i32_0 : i32, i32, i32, i32
  }
  func.func @transform_1(%arg0: i32, %arg1: i32) -> (i32, i32, i32, i32) {
    %c0_i32 = arith.constant 0 : i32
    %c0_i32_0 = arith.constant 0 : i32
    %c0_i32_1 = arith.constant 0 : i32
    return %arg0, %c0_i32, %arg1, %c0_i32_0 : i32, i32, i32, i32
  }
  func.func @transform_2(%arg0: i32, %arg1: i32) -> (i32, i32, i32, i32) {
    %c0_i32 = arith.constant 0 : i32
    %c0_i32_0 = arith.constant 0 : i32
    %c0_i32_1 = arith.constant 0 : i32
    return %arg0, %arg1, %c0_i32, %c0_i32_0 : i32, i32, i32, i32
  }
}

</mosaic_0001>

<llo_original>
// kernel: tpu_custom_call.1
$region0: #{tpu_custom_call.1}
  #allocation0 [shape = 'u32[]', space=smem, size = 0x4, offset = 0x4, fixed_abs, tag = 'smem constant byte address 0x4 - core index']
  #allocation1 [shape = 'u32[144,128]{1,0:T(1,128)}', space=vmem, size = 0x12000, scoped, tag = 'internal scratch']
  %s0 = inlined_call_operand.vmem [shape: f32[2,4,16,16], index: 0, kind: input, shape index: {}]
  %s1 = inlined_call_operand.vmem [shape: f32[2,4,16,8], index: 1, kind: input, shape index: {}]
  %s2 = inlined_call_operand.hbm [shape: f32[2,1,8,16], index: 2, kind: output, shape index: {}]
  %s3 = sld [smem:[#allocation0]]
  $region41: #{tpu_custom_call.1} parent=0
    _
  %s5 = ssub.s32 1, %s3
  %s6 = scalar_select 0, %s5, %s3
  $region1: #{tpu_custom_call.1} parent=0
    #allocation2 [shape = 'u8[8192]{0}', space=vmem, size = 0x2000, scoped, tag = 'output window, operand 0']
    #allocation3 [shape = 's32[2]{0}', space=sflag, size = 0x8, scoped, tag = 'scoped memory for tpu_custom_call.1']
    %7 = vsyncpa [#allocation3], 0
    %s8 = scalar_lea.sflag [#allocation3], 1
    %9 = vsyncpa %s8, 0
    loop: start=0, step=1, limit=4
    $region2: #{tpu_custom_call.1} parent=1 // loop_pre_header
      _
    $region3: #{tpu_custom_call.1} parent=1 // loop_header
      %s11 = sphi 0, %s15
      %p12 = scmp.ge.s32.totalorder %s11, 4
      %s18 = sphi 0, %s30
      %s19 = sphi 0, %s26
      %s20 = sphi 0, %s18
      %s21 = sphi 0, %s19
      %s22 = sphi 0, %s20
      %s23 = sphi 0, %s21
      %s35 = sphi 0, %s37
      %s38 = sphi 0, %s35
      %s39 = sphi 0, %s38
      %s55 = sphi 0, %s39
      %s63 = sphi 0, %s65
      %s66 = sphi 0, %s63
      %s67 = sphi 0, %s66
      %s83 = sphi 0, %s67
      %s91 = sphi 0, %s93
      %s94 = sphi 0, %s91
      %s95 = sphi 0, %s94
      %s111 = sphi 0, %s95
    $region4: #{tpu_custom_call.1} parent=1 // loop_header_branch
      %14 = sbr.rel (%p12) target = $region8
    $region5: #{tpu_custom_call.1} parent=1 // loop_body
      %s16 = ssub.s32 %s11, 1
      %s17 = ssub.s32 %s11, 2
      %s24 = sadd.s32 1, %s19
      %p25 = scmp.ge.s32.totalorder %s24, 1
      %s26 = scalar_select %p25, 0, %s24
      %s27 = sadd.s32 1, %s18
      %s28 = scalar_select %p25, %s27, %s18
      %p29 = scmp.ge.s32.totalorder %s28, 2
      %s30 = scalar_select %p29, 0, %s28
      %s31 = ssub.s32 %s18, %s30
      %s32 = ssub.s32 %s19, %s26
      %s33 = sor.u32 %s31, %s32
      %p34 = scmp.eq.s32.totalorder %s33, 0
      %s36 = sadd.s32 %s35, 1
      %s37 = scalar_select %p34, %s35, %s36
      %p40 = pneg %p34
      %p41 = scmp.eq.s32.totalorder %s11, 1
      %p42 = por %p40, %p41
      %p43 = scmp.ne.s32.totalorder %s35, %s38
      %p44 = scmp.eq.s32.totalorder %s11, 0
      %p45 = por %p43, %p44
      %p46 = scmp.ne.s32.totalorder %s35, %s38
      %p47 = scmp.eq.s32.totalorder %s16, 1
      %p48 = por %p46, %p47
      %p49 = scmp.ne.s32.totalorder %s38, %s39
      %p50 = scmp.eq.s32.totalorder %s16, 0
      %p51 = por %p49, %p50
      %p52 = scmp.ne.s32.totalorder %s38, %s39
      %p53 = scmp.eq.s32.totalorder %s17, 1
      %p54 = por %p52, %p53
      %p56 = scmp.ne.s32.totalorder %s39, %s55
      %p57 = scmp.eq.s32.totalorder %s17, 0
      %p58 = por %p56, %p57
      %s59 = ssub.s32 %s18, %s30
      %s60 = ssub.s32 %s19, %s26
      %s61 = sor.u32 %s59, %s60
      %p62 = scmp.eq.s32.totalorder %s61, 0
      %s64 = sadd.s32 %s63, 1
      %s65 = scalar_select %p62, %s63, %s64
      %p68 = pneg %p62
      %p69 = scmp.eq.s32.totalorder %s11, 1
      %p70 = por %p68, %p69
      %p71 = scmp.ne.s32.totalorder %s63, %s66
      %p72 = scmp.eq.s32.totalorder %s11, 0
      %p73 = por %p71, %p72
      %p74 = scmp.ne.s32.totalorder %s63, %s66
      %p75 = scmp.eq.s32.totalorder %s16, 1
      %p76 = por %p74, %p75
      %p77 = scmp.ne.s32.totalorder %s66, %s67
      %p78 = scmp.eq.s32.totalorder %s16, 0
      %p79 = por %p77, %p78
      %p80 = scmp.ne.s32.totalorder %s66, %s67
      %p81 = scmp.eq.s32.totalorder %s17, 1
      %p82 = por %p80, %p81
      %p84 = scmp.ne.s32.totalorder %s67, %s83
      %p85 = scmp.eq.s32.totalorder %s17, 0
      %p86 = por %p84, %p85
      %s87 = ssub.s32 %s18, %s30
      %s88 = ssub.s32 %s19, %s26
      %s89 = sor.u32 %s87, %s88
      %p90 = scmp.eq.s32.totalorder %s89, 0
      %s92 = sadd.s32 %s91, 1
      %s93 = scalar_select %p90, %s91, %s92
      %p96 = pneg %p90
      %p97 = scmp.eq.s32.totalorder %s11, 1
      %p98 = por %p96, %p97
      %p99 = scmp.ne.s32.totalorder %s91, %s94
      %p100 = scmp.eq.s32.totalorder %s11, 0
      %p101 = por %p99, %p100
      %p102 = scmp.ne.s32.totalorder %s91, %s94
      %p103 = scmp.eq.s32.totalorder %s16, 1
      %p104 = por %p102, %p103
      %p105 = scmp.ne.s32.totalorder %s94, %s95
      %p106 = scmp.eq.s32.totalorder %s16, 0
      %p107 = por %p105, %p106
      %p108 = scmp.ne.s32.totalorder %s94, %s95
      %p109 = scmp.eq.s32.totalorder %s17, 1
      %p110 = por %p108, %p109
      %p112 = scmp.ne.s32.totalorder %s95, %s111
      %p113 = scmp.eq.s32.totalorder %s17, 0
      %p114 = por %p112, %p113
      %p115 = scmp.le.s32.totalorder 1, %s11
      %p116 = scmp.lt.s32.totalorder %s11, 3
      %p117 = pnand %p115, %p116
      %p118 = pneg %p117
      // Predicated region
      $region9: #{tpu_custom_call.1} parent=5 // pred_check
        _
      $region10: #{tpu_custom_call.1} parent=5 // pred_check_branch
        %120 = sbr.rel (%p117) target = $region12
      $region11: #{tpu_custom_call.1} parent=5 // pred_region
        %s121 = ssub.s32 %s11, 1
      $region12: #{tpu_custom_call.1} parent=5 // pred_fallthru
        _
      %p122 = scmp.lt.s32.totalorder %s11, 2
      // Predicated region
      $region13: #{tpu_custom_call.1} parent=5 // pred_check
        %p123 = pneg %p122
      $region14: #{tpu_custom_call.1} parent=5 // pred_check_branch
        %125 = sbr.rel (%p123) target = $region16
      $region15: #{tpu_custom_call.1} parent=5 // pred_region
        // Predicated region
        $region17: #{tpu_custom_call.1} parent=15 // pred_check
          %p126 = pneg %p45
        $region18: #{tpu_custom_call.1} parent=15 // pred_check_branch
          %128 = sbr.rel (%p126) target = $region20
        $region19: #{tpu_custom_call.1} parent=15 // pred_region
          %s129 = smul.u32 2, %s19
          %p130 = scmp.lt.s32.totalorder %s18, 1
          %s131 = scalar_select %p130, %s18, 1
          %p132 = scmp.lt.s32.totalorder %s129, 1
          %s133 = scalar_select %p132, %s129, 1
          %s134 = smul.addr %s131, 8
          %s135 = sadd.s32 %s133, %s134
          %s136 = smul.addr %s135, 8
          %s137 = scalar_lea.vmem %s0, %s136
          %s138 = smul.u32 2, %s19
        $region20: #{tpu_custom_call.1} parent=15 // pred_fallthru
          _
        // Predicated region
        $region21: #{tpu_custom_call.1} parent=15 // pred_check
          %p139 = pneg %p73
        $region22: #{tpu_custom_call.1} parent=15 // pred_check_branch
          %141 = sbr.rel (%p139) target = $region24
        $region23: #{tpu_custom_call.1} parent=15 // pred_region
          %s142 = smul.u32 2, %s19
          %p143 = scmp.lt.s32.totalorder %s18, 1
          %s144 = scalar_select %p143, %s18, 1
          %p145 = scmp.lt.s32.totalorder %s142, 1
          %s146 = scalar_select %p145, %s142, 1
          %s147 = smul.addr %s144, 8
          %s148 = sadd.s32 %s146, %s147
          %s149 = smul.addr %s148, 8
          %s150 = scalar_lea.vmem %s1, %s149
          %s151 = smul.u32 2, %s19
        $region24: #{tpu_custom_call.1} parent=15 // pred_fallthru
          _
      $region16: #{tpu_custom_call.1} parent=5 // pred_fallthru
        _
      %p152 = scmp.le.s32.totalorder 1, %s11
      %p153 = scmp.lt.s32.totalorder %s11, 3
      %p154 = pnand %p152, %p153
      %p155 = pneg %p154
      // Predicated region
      $region25: #{tpu_custom_call.1} parent=5 // pred_check
        _
      $region26: #{tpu_custom_call.1} parent=5 // pred_check_branch
        %157 = sbr.rel (%p154) target = $region28
      $region27: #{tpu_custom_call.1} parent=5 // pred_region
        %s158 = ssub.s32 %s11, 1
        %s159 = smul.u32 2, %s21
        %p160 = scmp.lt.s32.totalorder %s20, 1
        %s161 = scalar_select %p160, %s20, 1
        %p162 = scmp.lt.s32.totalorder %s159, 1
        %s163 = scalar_select %p162, %s159, 1
        %s164 = smul.addr %s161, 8
        %s165 = sadd.s32 %s163, %s164
        %s166 = smul.addr %s165, 8
        %s167 = scalar_lea.vmem %s0, %s166
        %p168 = pneg %p51
        %p169 = pneg %p48
        %s170 = smul.u32 2, %s21
        %p171 = scmp.lt.s32.totalorder %s20, 1
        %s172 = scalar_select %p171, %s20, 1
        %p173 = scmp.lt.s32.totalorder %s170, 1
        %s174 = scalar_select %p173, %s170, 1
        %s175 = smul.addr %s172, 8
        %s176 = sadd.s32 %s174, %s175
        %s177 = smul.addr %s176, 8
        %s178 = scalar_lea.vmem %s1, %s177
        %p179 = pneg %p79
        %p180 = pneg %p76
        %p181 = pneg %p107
        %p182 = pneg %p104
        %s183 = sand.u32 %s94, 1
        %s184 = scalar_lea.sflag [#allocation3], %s183
        %s185 = sand.u32 %s94, 1
        %s186 = smul.addr %s185, 8
        %s187 = scalar_lea.vmem [#allocation2], %s186
        %s188 = smul.u32 2, %s21
        %p189 = scmp.lt.s32.totalorder %s20, 1
        %s190 = scalar_select %p189, %s20, 1
        %p191 = scmp.lt.s32.totalorder %s188, 1
        %s192 = scalar_select %p191, %s188, 1
        %s193 = smul.addr %s190, 8
        %s194 = sadd.s32 %s192, %s193
        %s195 = smul.addr %s194, 8
        %s196 = scalar_lea.vmem %s0, %s195
        %s197 = smul.u32 2, %s21
        %s198 = smul.u32 2, %s21
        %p199 = scmp.lt.s32.totalorder %s20, 1
        %s200 = scalar_select %p199, %s20, 1
        %p201 = scmp.lt.s32.totalorder %s198, 1
        %s202 = scalar_select %p201, %s198, 1
        %s203 = smul.addr %s200, 8
        %s204 = sadd.s32 %s202, %s203
        %s205 = smul.addr %s204, 8
        %s206 = scalar_lea.vmem %s1, %s205
        %s207 = smul.u32 2, %s21
        %v208 = vld [vmem:[%s196] sm:$0xff]
        %v209 = vld [vmem:[%s196 + $0x8] sm:$0xff]
        %v210 = vld [vmem:[%s196 + $0x10] sm:$0xff]
        %v211 = vld [vmem:[%s196 + $0x18] sm:$0xff]
        %v212 = vld [vmem:[%s196 + $0x20] sm:$0xff]
        %v213 = vld [vmem:[%s196 + $0x28] sm:$0xff]
        %v214 = vld [vmem:[%s196 + $0x30] sm:$0xff]
        %v215 = vld [vmem:[%s196 + $0x38] sm:$0xff]
        %vm216 = vcmask 130048
        %v217 = vsel %vm216, %v208, -inf
        %v218 = vsel %vm216, %v210, -inf
        %v219 = vsel %vm216, %v212, -inf
        %v220 = vmax.f32 %v217, %v219
        %v221 = vsel %vm216, %v214, -inf
        %v222 = vmax.f32 %v218, %v221
        %v223 = vmax.f32 %v220, %v222
        %v224 = vsel %vm216, %v209, -inf
        %v225 = vsel %vm216, %v211, -inf
        %v226 = vsel %vm216, %v213, -inf
        %v227 = vmax.f32 %v224, %v226
        %v228 = vsel %vm216, %v215, -inf
        %v229 = vmax.f32 %v225, %v228
        %v230 = vmax.f32 %v227, %v229
        %v231 = vsub.f32 %v208, %v223
        %v232 = vsub.f32 %v209, %v230
        %v233 = vsub.f32 %v210, %v223
        %v234 = vsub.f32 %v211, %v230
        %v235 = vsub.f32 %v212, %v223
        %v236 = vsub.f32 %v213, %v230
        %v237 = vsub.f32 %v214, %v223
        %v238 = vsub.f32 %v215, %v230
        %v239 = vmul.f32 %v231, 1.442695
        %v240 = vpow.pop %v239
        %v241 = vmul.f32 %v232, 1.442695
        %v242 = vpow.pop %v241
        %v243 = vmul.f32 %v233, 1.442695
        %v244 = vpow.pop %v243
        %v245 = vmul.f32 %v234, 1.442695
        %v246 = vpow.pop %v245
        %v247 = vmul.f32 %v235, 1.442695
        %v248 = vpow.pop %v247
        %v249 = vmul.f32 %v236, 1.442695
        %v250 = vpow.pop %v249
        %v251 = vmul.f32 %v237, 1.442695
        %v252 = vpow.pop %v251
        %v253 = vmul.f32 %v238, 1.442695
        %v254 = vpow.pop %v253
        %v255 = vsel %vm216, %v240, 0.0
        %v256 = vsel %vm216, %v244, 0.0
        %v257 = vadd.f32 %v255, %v256
        %v258 = vsel %vm216, %v248, 0.0
        %v259 = vadd.f32 %v257, %v258
        %v260 = vsel %vm216, %v252, 0.0
        %v261 = vadd.f32 %v259, %v260
        %v262 = vsel %vm216, %v242, 0.0
        %v263 = vsel %vm216, %v246, 0.0
        %v264 = vadd.f32 %v262, %v263
        %v265 = vsel %vm216, %v250, 0.0
        %v266 = vadd.f32 %v264, %v265
        %v267 = vsel %vm216, %v254, 0.0
        %v268 = vadd.f32 %v266, %v267
        %v269 = vlog2.pop %v261
        %v270 = vmul.f32 %v269, 0.6931472
        %v271 = vlog2.pop %v268
        %v272 = vmul.f32 %v271, 0.6931472
        %v273 = vld [vmem:[%s206] sm:$0xff]
        %v274 = vld [vmem:[%s206 + $0x8] sm:$0xff]
        %v275 = vld [vmem:[%s206 + $0x10] sm:$0xff]
        %v276 = vld [vmem:[%s206 + $0x18] sm:$0xff]
        %v277 = vld [vmem:[%s206 + $0x20] sm:$0xff]
        %v278 = vld [vmem:[%s206 + $0x28] sm:$0xff]
        %v279 = vld [vmem:[%s206 + $0x30] sm:$0xff]
        %v280 = vld [vmem:[%s206 + $0x38] sm:$0xff]
        %v281 = vlaneseq
        %v282 = vshrl.u32 %v281, 7
        %v283 = vlaneseq
        %v284 = vand.u32 %v283, 127
        %v285 = vmul.u32 %v284, 8
        %v286 = vmul.u32 %v282, 16
        %vm287 = vcmp.ge.s32.totalorder %v285, %v286
        %v288 = vadd.s32 %v282, 1
        %v289 = vmul.u32 %v288, 16
        %vm290 = vcmp.lt.s32.totalorder %v285, %v289
        %vm291 = vmand %vm287, %vm290
        %v292 = vsel %vm291, 1, 0
        %v293 = vcvt.s32.f32 %v292
        %v294 = vpack.c.bf16 %v274, %v273
        %v295 = vpack.c.bf16 %v276, %v275
        %v296 = vpack.c.bf16 %v278, %v277
        %v297 = vpack.c.bf16 %v280, %v279
        %v298 = vunpack.c.l.bf16 %v294
        %v299 = vunpack.c.h.bf16 %v294
        %v300 = vunpack.c.l.bf16 %v295
        %v301 = vunpack.c.h.bf16 %v295
        %v302 = vunpack.c.l.bf16 %v296
        %v303 = vunpack.c.h.bf16 %v296
        %v304 = vunpack.c.l.bf16 %v297
        %v305 = vunpack.c.h.bf16 %v297
        %v306 = vsub.f32 %v273, %v298
        %v307 = vsub.f32 %v274, %v299
        %v308 = vsub.f32 %v275, %v300
        %v309 = vsub.f32 %v276, %v301
        %v310 = vsub.f32 %v277, %v302
        %v311 = vsub.f32 %v278, %v303
        %v312 = vsub.f32 %v279, %v304
        %v313 = vsub.f32 %v280, %v305
        %vm314 = vcmask 64512
        %v316 = vsel %vm314, %v306, 0
        %v319 = vsel %vm314, %v307, 0
        %v322 = vsel %vm314, %v308, 0
        %v325 = vsel %vm314, %v309, 0
        %v328 = vsel %vm314, %v310, 0
        %v331 = vsel %vm314, %v311, 0
        %v334 = vsel %vm314, %v312, 0
        %v337 = vsel %vm314, %v313, 0
        %339 = vmatprep.subr.mxu0 0.0
        %340 = vmatpush1.msra.mxu0 0.0
        %341 = vmatprep.subr.mxu0 0.0
        %342 = vmatpush1.msra.mxu0 0.0
        %343 = vmatprep.subr.mxu0 0.0
        %344 = vmatpush1.msra.mxu0 0.0
        %345 = vmatprep.subr.mxu0 0.0
        %346 = vmatpush1.msra.mxu0 0.0
        %347 = vmatprep.subr.mxu0 0.0
        %348 = vmatpush1.msra.mxu0 0.0
        %349 = vmatprep.subr.mxu0 0.0
        %350 = vmatpush1.msra.mxu0 0.0
        %351 = vmatprep.subr.mxu0 0.0
        %352 = vmatpush1.msra.mxu0 0.0
        %353 = vmatprep.subr.mxu0 0.0
        %354 = vmatpush1.msra.mxu0 0.0
        %355 = vmatprep.subr.mxu0 0.0
        %356 = vmatpush1.msra.mxu0 0.0
        %357 = vmatprep.subr.mxu0 0.0
        %358 = vmatpush1.msra.mxu0 0.0
        %359 = vmatprep.subr.mxu0 0.0
        %360 = vmatpush1.msra.mxu0 0.0
        %361 = vmatprep.subr.mxu0 0.0
        %362 = vmatpush1.msra.mxu0 0.0
        %363 = vmatprep.subr.mxu0 0.0
        %364 = vmatpush1.msra.mxu0 0.0
        %365 = vmatprep.subr.mxu0 0.0
        %366 = vmatpush1.msra.mxu0 0.0
        %367 = vmatprep.subr.mxu0 0.0
        %368 = vmatpush1.msra.mxu0 0.0
        %369 = vmatprep.subr.mxu0 0.0
        %370 = vmatpush1.msra.mxu0 %v293
        %371 = vmatprep.subr.mxu0 0.0
        %372 = vmatpush2.msra.mxu0 0.0
        %373 = vmatprep.subr.mxu0 0.0
        %374 = vmatpush2.msra.mxu0 0.0
        %375 = vmatprep.subr.mxu0 0.0
        %376 = vmatpush2.msra.mxu0 0.0
        %377 = vmatprep.subr.mxu0 0.0
        %378 = vmatpush2.msra.mxu0 0.0
        %379 = vmatprep.subr.mxu0 0.0
        %380 = vmatpush2.msra.mxu0 0.0
        %381 = vmatprep.subr.mxu0 0.0
        %382 = vmatpush2.msra.mxu0 0.0
        %383 = vmatprep.subr.mxu0 0.0
        %384 = vmatpush2.msra.mxu0 0.0
        %385 = vmatprep.subr.mxu0 0.0
        %386 = vmatpush2.msra.mxu0 0.0
        %387 = vmatprep.subr.mxu0 0.0
        %388 = vmatpush2.msra.mxu0 0.0
        %389 = vmatprep.subr.mxu0 0.0
        %390 = vmatpush2.msra.mxu0 0.0
        %391 = vmatprep.subr.mxu0 0.0
        %392 = vmatpush2.msra.mxu0 0.0
        %393 = vmatprep.subr.mxu0 0.0
        %394 = vmatpush2.msra.mxu0 0.0
        %395 = vmatprep.subr.mxu0 0.0
        %396 = vmatpush2.msra.mxu0 0.0
        %397 = vmatprep.subr.mxu0 0.0
        %398 = vmatpush2.msra.mxu0 0.0
        %399 = vmatprep.subr.mxu0 0.0
        %400 = vmatpush2.msra.mxu0 0.0
        %401 = vmatprep.subr.mxu0 0.0
        %402 = vmatpush2.msra.mxu0 0.0
        %403 = vmatprep.mubr.f32.mxu0 0.0
        %404 = vmatmul.mubr.f32.gmra.mxu0 %v316
        %v405 = vpop.f32.mrf.mxu0
        %v406 = vadd.f32 0.0, %v405
        %v407 = vpop.f32.mrf.mxu0
        %408 = vmatprep.mubr.f32.mxu0 0.0
        %409 = vmatmul.mubr.f32.gmra.mxu0 %v319
        %v410 = vpop.f32.mrf.mxu0
        %v411 = vadd.f32 0.0, %v410
        %v412 = vpop.f32.mrf.mxu0
        %413 = vmatprep.mubr.f32.mxu0 0.0
        %414 = vmatmul.mubr.f32.gmra.mxu0 %v322
        %v415 = vpop.f32.mrf.mxu0
        %v416 = vadd.f32 0.0, %v415
        %v417 = vpop.f32.mrf.mxu0
        %418 = vmatprep.mubr.f32.mxu0 0.0
        %419 = vmatmul.mubr.f32.gmra.mxu0 %v325
        %v420 = vpop.f32.mrf.mxu0
        %v421 = vadd.f32 0.0, %v420
        %v422 = vpop.f32.mrf.mxu0
        %423 = vmatprep.mubr.f32.mxu0 0.0
        %424 = vmatmul.mubr.f32.gmra.mxu0 %v328
        %v425 = vpop.f32.mrf.mxu0
        %v426 = vadd.f32 0.0, %v425
        %v427 = vpop.f32.mrf.mxu0
        %428 = vmatprep.mubr.f32.mxu0 0.0
        %429 = vmatmul.mubr.f32.gmra.mxu0 %v331
        %v430 = vpop.f32.mrf.mxu0
        %v431 = vadd.f32 0.0, %v430
        %v432 = vpop.f32.mrf.mxu0
        %433 = vmatprep.mubr.f32.mxu0 0.0
        %434 = vmatmul.mubr.f32.gmra.mxu0 %v334
        %v435 = vpop.f32.mrf.mxu0
        %v436 = vadd.f32 0.0, %v435
        %v437 = vpop.f32.mrf.mxu0
        %438 = vmatprep.mubr.f32.mxu0 0.0
        %439 = vmatmul.mubr.f32.gmra.mxu0 %v337
        %v440 = vpop.f32.mrf.mxu0
        %v441 = vadd.f32 0.0, %v440
        %v442 = vpop.f32.mrf.mxu0
        %443 = vdwg.mxu0
        %v445 = vsel %vm314, %v298, 0
        %v448 = vsel %vm314, %v299, 0
        %v451 = vsel %vm314, %v300, 0
        %v454 = vsel %vm314, %v301, 0
        %v457 = vsel %vm314, %v302, 0
        %v460 = vsel %vm314, %v303, 0
        %v463 = vsel %vm314, %v304, 0
        %v466 = vsel %vm314, %v305, 0
        %468 = vmatprep.subr.mxu0 0.0
        %469 = vmatpush1.msra.mxu0 0.0
        %470 = vmatprep.subr.mxu0 0.0
        %471 = vmatpush1.msra.mxu0 0.0
        %472 = vmatprep.subr.mxu0 0.0
        %473 = vmatpush1.msra.mxu0 0.0
        %474 = vmatprep.subr.mxu0 0.0
        %475 = vmatpush1.msra.mxu0 0.0
        %476 = vmatprep.subr.mxu0 0.0
        %477 = vmatpush1.msra.mxu0 0.0
        %478 = vmatprep.subr.mxu0 0.0
        %479 = vmatpush1.msra.mxu0 0.0
        %480 = vmatprep.subr.mxu0 0.0
        %481 = vmatpush1.msra.mxu0 0.0
        %482 = vmatprep.subr.mxu0 0.0
        %483 = vmatpush1.msra.mxu0 0.0
        %484 = vmatprep.subr.mxu0 0.0
        %485 = vmatpush1.msra.mxu0 0.0
        %486 = vmatprep.subr.mxu0 0.0
        %487 = vmatpush1.msra.mxu0 0.0
        %488 = vmatprep.subr.mxu0 0.0
        %489 = vmatpush1.msra.mxu0 0.0
        %490 = vmatprep.subr.mxu0 0.0
        %491 = vmatpush1.msra.mxu0 0.0
        %492 = vmatprep.subr.mxu0 0.0
        %493 = vmatpush1.msra.mxu0 0.0
        %494 = vmatprep.subr.mxu0 0.0
        %495 = vmatpush1.msra.mxu0 0.0
        %496 = vmatprep.subr.mxu0 0.0
        %497 = vmatpush1.msra.mxu0 0.0
        %498 = vmatprep.subr.mxu0 0.0
        %499 = vmatpush1.msra.mxu0 %v293
        %500 = vmatprep.subr.mxu0 0.0
        %501 = vmatpush2.msra.mxu0 0.0
        %502 = vmatprep.subr.mxu0 0.0
        %503 = vmatpush2.msra.mxu0 0.0
        %504 = vmatprep.subr.mxu0 0.0
        %505 = vmatpush2.msra.mxu0 0.0
        %506 = vmatprep.subr.mxu0 0.0
        %507 = vmatpush2.msra.mxu0 0.0
        %508 = vmatprep.subr.mxu0 0.0
        %509 = vmatpush2.msra.mxu0 0.0
        %510 = vmatprep.subr.mxu0 0.0
        %511 = vmatpush2.msra.mxu0 0.0
        %512 = vmatprep.subr.mxu0 0.0
        %513 = vmatpush2.msra.mxu0 0.0
        %514 = vmatprep.subr.mxu0 0.0
        %515 = vmatpush2.msra.mxu0 0.0
        %516 = vmatprep.subr.mxu0 0.0
        %517 = vmatpush2.msra.mxu0 0.0
        %518 = vmatprep.subr.mxu0 0.0
        %519 = vmatpush2.msra.mxu0 0.0
        %520 = vmatprep.subr.mxu0 0.0
        %521 = vmatpush2.msra.mxu0 0.0
        %522 = vmatprep.subr.mxu0 0.0
        %523 = vmatpush2.msra.mxu0 0.0
        %524 = vmatprep.subr.mxu0 0.0
        %525 = vmatpush2.msra.mxu0 0.0
        %526 = vmatprep.subr.mxu0 0.0
        %527 = vmatpush2.msra.mxu0 0.0
        %528 = vmatprep.subr.mxu0 0.0
        %529 = vmatpush2.msra.mxu0 0.0
        %530 = vmatprep.subr.mxu0 0.0
        %531 = vmatpush2.msra.mxu0 0.0
        %532 = vmatprep.mubr.f32.mxu0 0.0
        %533 = vmatmul.mubr.f32.gmra.mxu0 %v445
        %v534 = vpop.f32.mrf.mxu0
        %v535 = vadd.f32 %v406, %v534
        %v536 = vpop.f32.mrf.mxu0
        %537 = vmatprep.mubr.f32.mxu0 0.0
        %538 = vmatmul.mubr.f32.gmra.mxu0 %v448
        %v539 = vpop.f32.mrf.mxu0
        %v540 = vadd.f32 %v411, %v539
        %v541 = vpop.f32.mrf.mxu0
        %542 = vmatprep.mubr.f32.mxu0 0.0
        %543 = vmatmul.mubr.f32.gmra.mxu0 %v451
        %v544 = vpop.f32.mrf.mxu0
        %v545 = vadd.f32 %v416, %v544
        %v546 = vpop.f32.mrf.mxu0
        %547 = vmatprep.mubr.f32.mxu0 0.0
        %548 = vmatmul.mubr.f32.gmra.mxu0 %v454
        %v549 = vpop.f32.mrf.mxu0
        %v550 = vadd.f32 %v421, %v549
        %v551 = vpop.f32.mrf.mxu0
        %552 = vmatprep.mubr.f32.mxu0 0.0
        %553 = vmatmul.mubr.f32.gmra.mxu0 %v457
        %v554 = vpop.f32.mrf.mxu0
        %v555 = vadd.f32 %v426, %v554
        %v556 = vpop.f32.mrf.mxu0
        %557 = vmatprep.mubr.f32.mxu0 0.0
        %558 = vmatmul.mubr.f32.gmra.mxu0 %v460
        %v559 = vpop.f32.mrf.mxu0
        %v560 = vadd.f32 %v431, %v559
        %v561 = vpop.f32.mrf.mxu0
        %562 = vmatprep.mubr.f32.mxu0 0.0
        %563 = vmatmul.mubr.f32.gmra.mxu0 %v463
        %v564 = vpop.f32.mrf.mxu0
        %v565 = vadd.f32 %v436, %v564
        %v566 = vpop.f32.mrf.mxu0
        %567 = vmatprep.mubr.f32.mxu0 0.0
        %568 = vmatmul.mubr.f32.gmra.mxu0 %v466
        %v569 = vpop.f32.mrf.mxu0
        %v570 = vadd.f32 %v441, %v569
        %v571 = vpop.f32.mrf.mxu0
        %572 = vdwg.mxu0
        %v573 = vadd.f32 %v223, %v270
        %v574 = vadd.f32 %v230, %v272
        %v575 = vsub.f32 %v573, %v208
        %v576 = vsub.f32 %v574, %v209
        %v577 = vsub.f32 %v573, %v210
        %v578 = vsub.f32 %v574, %v211
        %v579 = vsub.f32 %v573, %v212
        %v580 = vsub.f32 %v574, %v213
        %v581 = vsub.f32 %v573, %v214
        %v582 = vsub.f32 %v574, %v215
        %v583 = vmul.f32 %v575, %v535
        %v584 = vmul.f32 %v576, %v540
        %v585 = vmul.f32 %v577, %v545
        %v586 = vmul.f32 %v578, %v550
        %v587 = vmul.f32 %v579, %v555
        %v588 = vmul.f32 %v580, %v560
        %v589 = vmul.f32 %v581, %v565
        %v590 = vmul.f32 %v582, %v570
        %v591 = vadd.f32 %v261, %v240
        %v592 = vadd.f32 %v268, %v242
        %v593 = vadd.f32 %v261, %v244
        %v594 = vadd.f32 %v268, %v246
        %v595 = vadd.f32 %v261, %v248
        %v596 = vadd.f32 %v268, %v250
        %v597 = vadd.f32 %v261, %v252
        %v598 = vadd.f32 %v268, %v254
        %v599 = vlog2.pop %v591
        %v600 = vmul.f32 %v599, 0.6931472
        %v601 = vlog2.pop %v592
        %v602 = vmul.f32 %v601, 0.6931472
        %v603 = vlog2.pop %v593
        %v604 = vmul.f32 %v603, 0.6931472
        %v605 = vlog2.pop %v594
        %v606 = vmul.f32 %v605, 0.6931472
        %v607 = vlog2.pop %v595
        %v608 = vmul.f32 %v607, 0.6931472
        %v609 = vlog2.pop %v596
        %v610 = vmul.f32 %v609, 0.6931472
        %v611 = vlog2.pop %v597
        %v612 = vmul.f32 %v611, 0.6931472
        %v613 = vlog2.pop %v598
        %v614 = vmul.f32 %v613, 0.6931472
        %v615 = vsub.f32 %v600, %v270
        %v616 = vsub.f32 %v602, %v272
        %v617 = vsub.f32 %v604, %v270
        %v618 = vsub.f32 %v606, %v272
        %v619 = vsub.f32 %v608, %v270
        %v620 = vsub.f32 %v610, %v272
        %v621 = vsub.f32 %v612, %v270
        %v622 = vsub.f32 %v614, %v272
        %v623 = vadd.f32 %v583, %v615
        %v624 = vadd.f32 %v584, %v616
        %v625 = vadd.f32 %v585, %v617
        %v626 = vadd.f32 %v586, %v618
        %v627 = vadd.f32 %v587, %v619
        %v628 = vadd.f32 %v588, %v620
        %v629 = vadd.f32 %v589, %v621
        %v630 = vadd.f32 %v590, %v622
        %v631 = vsel %vm216, %v623, 0.0
        %v632 = vsel %vm216, %v625, 0.0
        %v633 = vadd.f32 %v631, %v632
        %v634 = vsel %vm216, %v627, 0.0
        %v635 = vadd.f32 %v633, %v634
        %v636 = vsel %vm216, %v629, 0.0
        %v637 = vadd.f32 %v635, %v636
        %v638 = vsel %vm216, %v624, 0.0
        %v639 = vsel %vm216, %v626, 0.0
        %v640 = vadd.f32 %v638, %v639
        %v641 = vsel %vm216, %v628, 0.0
        %v642 = vadd.f32 %v640, %v641
        %v643 = vsel %vm216, %v630, 0.0
        %v644 = vadd.f32 %v642, %v643
        %v645 = vsel %vm216, %v637, 0.0
        %v646 = vsel %vm216, %v644, 0.0
        %v647 = vadd.f32 %v645, %v646
        %648 = vst.msk [vmem:[%s187] sm:$0xff] %vm216, %v647
        %s649 = sand.u32 %s94, 1
        %s650 = scalar_lea.sflag [#allocation3], %s649
        %s651 = sand.u32 %s94, 1
        %s652 = smul.addr %s651, 8
        %s653 = scalar_lea.vmem [#allocation2], %s652
        // Predicated region
        $region29: #{tpu_custom_call.1} parent=27 // pred_check
          %p654 = pneg %p104
        $region30: #{tpu_custom_call.1} parent=27 // pred_check_branch
          %656 = sbr.rel (%p654) target = $region32
        $region31: #{tpu_custom_call.1} parent=27 // pred_region
          %s658 = ssub.s32 128, 128
          %659 = vsyncadd %s650, %s658
          %s660 = sadd.s32 %s21, %s20
          %s661 = smul.addr %s660, 128
          %s662 = scalar_lea.hbm %s2, %s661
          %s664 = sshll.u32 %s653, 4
          %s665 = int_to_ptr.vmem [resolvable:$true] %s664
          %667 = dma.vmem_to_hbm [thread:$0]  %s665, 128, %s662, %s650
        $region32: #{tpu_custom_call.1} parent=27 // pred_fallthru
          _
      $region28: #{tpu_custom_call.1} parent=5 // pred_fallthru
        _
      %p668 = scmp.le.s32.totalorder 2, %s11
      // Predicated region
      $region33: #{tpu_custom_call.1} parent=5 // pred_check
        %p669 = pneg %p668
      $region34: #{tpu_custom_call.1} parent=5 // pred_check_branch
        %671 = sbr.rel (%p669) target = $region36
      $region35: #{tpu_custom_call.1} parent=5 // pred_region
        %s672 = ssub.s32 %s11, 2
        // Predicated region
        $region37: #{tpu_custom_call.1} parent=35 // pred_check
          %p673 = pneg %p110
        $region38: #{tpu_custom_call.1} parent=35 // pred_check_branch
          %675 = sbr.rel (%p673) target = $region40
        $region39: #{tpu_custom_call.1} parent=35 // pred_region
          %s676 = sand.u32 %s95, 1
          %s677 = scalar_lea.sflag [#allocation3], %s676
          %s678 = sand.u32 %s95, 1
          %s679 = smul.addr %s678, 8
          %s680 = scalar_lea.vmem [#allocation2], %s679
          %681 = dma.done %s677, 128
        $region40: #{tpu_custom_call.1} parent=35 // pred_fallthru
          _
      $region36: #{tpu_custom_call.1} parent=5 // pred_fallthru
        _
    $region6: #{tpu_custom_call.1} parent=1 // loop_footer
      %s15 = sadd.s32 1, %s11
    $region7: #{tpu_custom_call.1} parent=1 // loop_footer_branch
      %10 = sbr.rel target = $region3
    $region8: #{tpu_custom_call.1} parent=1 // loop_exit
      _
    %682 = vsyncpa [#allocation3], 1
    %s683 = scalar_lea.sflag [#allocation3], 1
    %684 = vsyncpa %s683, 1

</llo_original>
